<compile_context>
chip_gen: v7x
topology: tpu7x:2x2x1
jax: 0.10.0
libtpu: 0.0.40
codegen_flags: <defaults>
</compile_context>

<pallas_src>
import jax
import jax.numpy as jnp
from jax.experimental import pallas as pl
from jax.experimental.pallas import tpu as pltpu


def _enc_kernel(fr_ref, w_ref, b_ref, o_ref):
    """One (batch, time-tile) grid step.

    fr_ref : (1, K, TILE_T)  im2col frames for this batch/time tile (T on lanes)
    w_ref  : (C, K)          flattened Conv1d weight
    b_ref  : (C, 1)          bias
    o_ref  : (1, C, TILE_T)  lane-dense block of the (B, C, T) output
    """
    y = jnp.dot(w_ref[...], fr_ref[0], preferred_element_type=jnp.float32)
    y = y + b_ref[...]                                        # broadcast over lanes
    o_ref[0] = jnp.maximum(y, 0.0).astype(o_ref.dtype)


def speech_encoder_short(x, weight, bias, short_kernel, *, tile_t=512):
    """Forward pass of SpeechEncoderShort.

    Args:
      x:            (B, L) float32 waveform.
      weight:       (C, 1, K) float32 Conv1d weight (PyTorch layout).
      bias:         (C,) float32 Conv1d bias.
      short_kernel: int, kernel size K (stride is K // 2).
      tile_t:       time-tile width (lanes) for the pipelined grid.

    Returns:
      (y, init_len) with y of shape (B, C, T) — same as the PyTorch module.
    """
    B, L = x.shape
    C = weight.shape[0]
    K = int(short_kernel)
    hop = K // 2
    assert K % 2 == 0, "short_kernel must be even (stride = K // 2)"
    assert L >= K, "input shorter than the kernel"

    init_len = L
    # Right-pad so that (L - K) is a multiple of hop (mirrors F.pad in torch).
    rem = (L - K) % hop
    if rem != 0:
        x = jnp.pad(x, ((0, 0), (0, hop - rem)))
    Lp = x.shape[-1]
    T = (Lp - K) // hop + 1                     # Lp == (T + 1) * hop

    # im2col without a gather: hop-chunk the waveform, put time on the lane
    # axis, stack the two half-windows.  frames[b, k, t] = x[b, t*hop + k].
    xT = x.reshape(B, T + 1, hop).transpose(0, 2, 1)                 # (B, hop, T+1)
    frames = jnp.concatenate([xT[:, :, :T], xT[:, :, 1:]], axis=1)   # (B, K, T)

    w = weight.reshape(C, K).astype(jnp.float32)                     # (C, K)
    b2 = bias.reshape(C, 1).astype(jnp.float32)                      # (C, 1)

    # Time-tile: full T if small, otherwise a lane-aligned tile (mult. of 128).
    tt = T if T < tile_t else tile_t
    nt = pl.cdiv(T, tt)

    out = pl.pallas_call(
        _enc_kernel,
        out_shape=jax.ShapeDtypeStruct((B, C, T), jnp.float32),
        grid=(B, nt),
        in_specs=[
            pl.BlockSpec((1, K, tt), lambda b, t: (b, 0, t)),
            pl.BlockSpec((C, K), lambda b, t: (0, 0)),
            pl.BlockSpec((C, 1), lambda b, t: (0, 0)),
        ],
        out_specs=pl.BlockSpec((1, C, tt), lambda b, t: (b, 0, t)),
        compiler_params=pltpu.CompilerParams(
            dimension_semantics=("parallel", "parallel")),
        cost_estimate=pl.CostEstimate(
            flops=2 * B * T * K * C,
            transcendentals=0,
            bytes_accessed=4 * (B * K * T + B * C * T + C * (K + 1))),
    )(frames, w, b2)

    # TODO(synk): bf16 frames/weights (f32 accumulate) would halve input DMA
    # bytes on v6e/v7x if downstream tolerates the precision.
    return out, init_len


def _reference(x, weight, bias, short_kernel):
    # Pure-JAX reference mirroring the PyTorch semantics, for sanity checking.
    B, L = x.shape
    K = short_kernel
    hop = K // 2
    rem = (L - K) % hop
    if rem != 0:
        x = jnp.pad(x, ((0, 0), (0, hop - rem)))
    y = jax.lax.conv_general_dilated(
        x[:, None, :], weight, window_strides=(hop,), padding="VALID",
        dimension_numbers=("NCH", "OIH", "NCH"))
    y = y + bias[None, :, None]
    return jnp.maximum(y, 0.0), L


if __name__ == "__main__":
    key = jax.random.PRNGKey(0)
    k_x, k_w, k_b = jax.random.split(key, 3)

    n_channels = 32
    short_kernel = 16          # stride = 8
    B, L = 2, 205              # 205 forces the padding branch (pad by 3)

    x = jax.random.normal(k_x, (B, L), dtype=jnp.float32)

    # Deterministic Conv1d-style init: U(-1/sqrt(K), 1/sqrt(K)).
    bound = 1.0 / (short_kernel ** 0.5)
    weight = jax.random.uniform(k_w, (n_channels, 1, short_kernel),
                                minval=-bound, maxval=bound, dtype=jnp.float32)
    bias = jax.random.uniform(k_b, (n_channels,),
                              minval=-bound, maxval=bound, dtype=jnp.float32)

    y, init_len = speech_encoder_short(x, weight, bias, short_kernel)
    y = jax.block_until_ready(y)

    y_ref, init_len_ref = _reference(x, weight, bias, short_kernel)
    assert init_len == init_len_ref == L
    assert y.shape == y_ref.shape, (y.shape, y_ref.shape)
    assert jnp.max(jnp.abs(y - y_ref)) < 1e-4

    print("KERNEL_OK")
</pallas_src>

<mosaic_0001>
module attributes {stable_mosaic.version = 11 : i64} {
  func.func @_enc_kernel(%arg0: i32, %arg1: i32, %arg2: memref<1x16x25xf32, #tpu.memory_space<vmem>>, %arg3: memref<32x16xf32, #tpu.memory_space<vmem>>, %arg4: memref<32x1xf32, #tpu.memory_space<vmem>>, %arg5: memref<1x32x25xf32, #tpu.memory_space<vmem>>) attributes {dimension_semantics = [#tpu.dimension_semantics<parallel>, #tpu.dimension_semantics<parallel>], iteration_bounds = array<i64: 2, 1>, scalar_prefetch = 0 : i64, scratch_operands = 0 : i64, tpu.core_type = #tpu.core_type<tc>, window_params = [{transform_indices = @transform_0, window_bounds = array<i64: 1, 16, 25>}, {pipeline_mode = #tpu.pipeline_mode<synchronous>, transform_indices = @transform_1, window_bounds = array<i64: 32, 16>}, {pipeline_mode = #tpu.pipeline_mode<synchronous>, transform_indices = @transform_2, window_bounds = array<i64: 32, 1>}, {transform_indices = @transform_3, window_bounds = array<i64: 1, 32, 25>}]} {
    %c0 = arith.constant 0 : index
    %c0_0 = arith.constant 0 : index
    %0 = vector.load %arg3[%c0, %c0_0] : memref<32x16xf32, #tpu.memory_space<vmem>>, vector<32x16xf32>
    %c0_1 = arith.constant 0 : index
    %c0_2 = arith.constant 0 : index
    %c0_3 = arith.constant 0 : index
    %1 = vector.load %arg2[%c0_1, %c0_2, %c0_3] : memref<1x16x25xf32, #tpu.memory_space<vmem>>, vector<1x16x25xf32>
    %2 = vector.shape_cast %1 : vector<1x16x25xf32> to vector<16x25xf32>
    %cst = arith.constant dense<0.000000e+00> : vector<32x25xf32>
    %3 = tpu.matmul %0, %2, %cst {dimension_numbers = #tpu.dot_dimension_numbers<[1], [0], [0], [1], [0, 0, 1, 1], [], []>} : vector<32x16xf32>, vector<16x25xf32>, vector<32x25xf32> -> vector<32x25xf32>
    %c0_4 = arith.constant 0 : index
    %c0_5 = arith.constant 0 : index
    %4 = vector.load %arg4[%c0_4, %c0_5] : memref<32x1xf32, #tpu.memory_space<vmem>>, vector<32x1xf32>
    %5 = vector.broadcast %4 : vector<32x1xf32> to vector<32x25xf32>
    %6 = arith.addf %3, %5 : vector<32x25xf32>
    %cst_6 = arith.constant 0.000000e+00 : f32
    %7 = vector.broadcast %cst_6 : f32 to vector<32x25xf32>
    %8 = arith.maximumf %6, %7 : vector<32x25xf32>
    %c0_7 = arith.constant 0 : index
    %c0_8 = arith.constant 0 : index
    %c0_9 = arith.constant 0 : index
    %9 = vector.load %arg5[%c0_7, %c0_8, %c0_9] : memref<1x32x25xf32, #tpu.memory_space<vmem>>, vector<1x32x25xf32>
    %10 = vector.shape_cast %9 : vector<1x32x25xf32> to vector<32x25xf32>
    %11 = vector.shape_cast %8 : vector<32x25xf32> to vector<1x32x25xf32>
    tpu.vector_store %arg5[%c0_7, %c0_8, %c0_9], %11 {strides = array<i32>} : memref<1x32x25xf32, #tpu.memory_space<vmem>>, vector<1x32x25xf32>,
    return
  }
  func.func @transform_0(%arg0: i32, %arg1: i32) -> (i32, i32, i32) {
    %c0_i32 = arith.constant 0 : i32
    %c0_i32_0 = arith.constant 0 : i32
    return %arg0, %c0_i32, %arg1 : i32, i32, i32
  }
  func.func @transform_1(%arg0: i32, %arg1: i32) -> (i32, i32) {
    %c0_i32 = arith.constant 0 : i32
    %c0_i32_0 = arith.constant 0 : i32
    %c0_i32_1 = arith.constant 0 : i32
    return %c0_i32, %c0_i32_0 : i32, i32
  }
  func.func @transform_2(%arg0: i32, %arg1: i32) -> (i32, i32) {
    %c0_i32 = arith.constant 0 : i32
    %c0_i32_0 = arith.constant 0 : i32
    %c0_i32_1 = arith.constant 0 : i32
    return %c0_i32, %c0_i32_0 : i32, i32
  }
  func.func @transform_3(%arg0: i32, %arg1: i32) -> (i32, i32, i32) {
    %c0_i32 = arith.constant 0 : i32
    %c0_i32_0 = arith.constant 0 : i32
    return %arg0, %c0_i32, %arg1 : i32, i32, i32
  }
}

</mosaic_0001>

<llo_original>
// kernel: tpu_custom_call.1
$region0: #{tpu_custom_call.1}
  #allocation0 [shape = 'u32[]', space=smem, size = 0x4, offset = 0x4, fixed_abs, tag = 'smem constant byte address 0x4 - core index']
  #allocation1 [shape = 'u32[144,128]{1,0:T(1,128)}', space=vmem, size = 0x12000, scoped, tag = 'internal scratch']
  %s0 = inlined_call_operand.vmem [shape: f32[2,16,25], index: 0, kind: input, shape index: {}]
  %s1 = inlined_call_operand.vmem [shape: f32[32,16], index: 1, kind: input, shape index: {}]
  %s2 = inlined_call_operand.vmem [shape: f32[32,1], index: 2, kind: input, shape index: {}]
  %s3 = inlined_call_operand.vmem [shape: f32[2,32,25], index: 3, kind: output, shape index: {}]
  %s4 = sld [smem:[#allocation0]]
  $region45: #{tpu_custom_call.1} parent=0
    _
  %s6 = ssub.s32 1, %s4
  %s7 = scalar_select 0, %s6, %s4
  loop: start=0, step=1, limit=4
  $region2: #{tpu_custom_call.1} parent=0 // loop_pre_header
    _
  $region3: #{tpu_custom_call.1} parent=0 // loop_header
    %s9 = sphi 0, %s13
    %p10 = scmp.ge.s32.totalorder %s9, 4
    %s16 = sphi 0, %s28
    %s17 = sphi 0, %s24
    %s18 = sphi 0, %s16
    %s19 = sphi 0, %s17
    %s20 = sphi 0, %s18
    %s21 = sphi 0, %s19
    %s33 = sphi 0, %s35
    %s36 = sphi 0, %s33
    %s37 = sphi 0, %s36
    %s53 = sphi 0, %s37
    %s57 = sphi 0, %s57
    %s59 = sphi 0, %s57
    %s60 = sphi 0, %s59
    %s74 = sphi 0, %s60
    %s78 = sphi 0, %s78
    %s80 = sphi 0, %s78
    %s81 = sphi 0, %s80
    %s95 = sphi 0, %s81
    %s103 = sphi 0, %s105
    %s106 = sphi 0, %s103
    %s107 = sphi 0, %s106
    %s123 = sphi 0, %s107
  $region4: #{tpu_custom_call.1} parent=0 // loop_header_branch
    %12 = sbr.rel (%p10) target = $region8
  $region5: #{tpu_custom_call.1} parent=0 // loop_body
    %s14 = ssub.s32 %s9, 1
    %s15 = ssub.s32 %s9, 2
    %s22 = sadd.s32 1, %s17
    %p23 = scmp.ge.s32.totalorder %s22, 1
    %s24 = scalar_select %p23, 0, %s22
    %s25 = sadd.s32 1, %s16
    %s26 = scalar_select %p23, %s25, %s16
    %p27 = scmp.ge.s32.totalorder %s26, 2
    %s28 = scalar_select %p27, 0, %s26
    %s29 = ssub.s32 %s16, %s28
    %s30 = ssub.s32 %s17, %s24
    %s31 = sor.u32 %s29, %s30
    %p32 = scmp.eq.s32.totalorder %s31, 0
    %s34 = sadd.s32 %s33, 1
    %s35 = scalar_select %p32, %s33, %s34
    %p38 = pneg %p32
    %p39 = scmp.eq.s32.totalorder %s9, 1
    %p40 = por %p38, %p39
    %p41 = scmp.ne.s32.totalorder %s33, %s36
    %p42 = scmp.eq.s32.totalorder %s9, 0
    %p43 = por %p41, %p42
    %p44 = scmp.ne.s32.totalorder %s33, %s36
    %p45 = scmp.eq.s32.totalorder %s14, 1
    %p46 = por %p44, %p45
    %p47 = scmp.ne.s32.totalorder %s36, %s37
    %p48 = scmp.eq.s32.totalorder %s14, 0
    %p49 = por %p47, %p48
    %p50 = scmp.ne.s32.totalorder %s36, %s37
    %p51 = scmp.eq.s32.totalorder %s15, 1
    %p52 = por %p50, %p51
    %p54 = scmp.ne.s32.totalorder %s37, %s53
    %p55 = scmp.eq.s32.totalorder %s15, 0
    %p56 = por %p54, %p55
    %s58 = sadd.s32 %s57, 1
    %p61 = scmp.eq.s32.totalorder %s9, 1
    %p62 = scmp.ne.s32.totalorder %s57, %s59
    %p63 = scmp.eq.s32.totalorder %s9, 0
    %p64 = por %p62, %p63
    %p65 = scmp.ne.s32.totalorder %s57, %s59
    %p66 = scmp.eq.s32.totalorder %s14, 1
    %p67 = por %p65, %p66
    %p68 = scmp.ne.s32.totalorder %s59, %s60
    %p69 = scmp.eq.s32.totalorder %s14, 0
    %p70 = por %p68, %p69
    %p71 = scmp.ne.s32.totalorder %s59, %s60
    %p72 = scmp.eq.s32.totalorder %s15, 1
    %p73 = por %p71, %p72
    %p75 = scmp.ne.s32.totalorder %s60, %s74
    %p76 = scmp.eq.s32.totalorder %s15, 0
    %p77 = por %p75, %p76
    %s79 = sadd.s32 %s78, 1
    %p82 = scmp.eq.s32.totalorder %s9, 1
    %p83 = scmp.ne.s32.totalorder %s78, %s80
    %p84 = scmp.eq.s32.totalorder %s9, 0
    %p85 = por %p83, %p84
    %p86 = scmp.ne.s32.totalorder %s78, %s80
    %p87 = scmp.eq.s32.totalorder %s14, 1
    %p88 = por %p86, %p87
    %p89 = scmp.ne.s32.totalorder %s80, %s81
    %p90 = scmp.eq.s32.totalorder %s14, 0
    %p91 = por %p89, %p90
    %p92 = scmp.ne.s32.totalorder %s80, %s81
    %p93 = scmp.eq.s32.totalorder %s15, 1
    %p94 = por %p92, %p93
    %p96 = scmp.ne.s32.totalorder %s81, %s95
    %p97 = scmp.eq.s32.totalorder %s15, 0
    %p98 = por %p96, %p97
    %s99 = ssub.s32 %s16, %s28
    %s100 = ssub.s32 %s17, %s24
    %s101 = sor.u32 %s99, %s100
    %p102 = scmp.eq.s32.totalorder %s101, 0
    %s104 = sadd.s32 %s103, 1
    %s105 = scalar_select %p102, %s103, %s104
    %p108 = pneg %p102
    %p109 = scmp.eq.s32.totalorder %s9, 1
    %p110 = por %p108, %p109
    %p111 = scmp.ne.s32.totalorder %s103, %s106
    %p112 = scmp.eq.s32.totalorder %s9, 0
    %p113 = por %p111, %p112
    %p114 = scmp.ne.s32.totalorder %s103, %s106
    %p115 = scmp.eq.s32.totalorder %s14, 1
    %p116 = por %p114, %p115
    %p117 = scmp.ne.s32.totalorder %s106, %s107
    %p118 = scmp.eq.s32.totalorder %s14, 0
    %p119 = por %p117, %p118
    %p120 = scmp.ne.s32.totalorder %s106, %s107
    %p121 = scmp.eq.s32.totalorder %s15, 1
    %p122 = por %p120, %p121
    %p124 = scmp.ne.s32.totalorder %s107, %s123
    %p125 = scmp.eq.s32.totalorder %s15, 0
    %p126 = por %p124, %p125
    %p127 = scmp.le.s32.totalorder 1, %s9
    %p128 = scmp.lt.s32.totalorder %s9, 3
    %p129 = pnand %p127, %p128
    %p130 = pneg %p129
    // Predicated region
    $region9: #{tpu_custom_call.1} parent=5 // pred_check
      _
    $region10: #{tpu_custom_call.1} parent=5 // pred_check_branch
      %132 = sbr.rel (%p129) target = $region12
    $region11: #{tpu_custom_call.1} parent=5 // pred_region
      %s133 = ssub.s32 %s9, 1
      // Predicated region
      $region13: #{tpu_custom_call.1} parent=11 // pred_check
        %p134 = pneg %p70
      $region14: #{tpu_custom_call.1} parent=11 // pred_check_branch
        %136 = sbr.rel (%p134) target = $region16
      $region15: #{tpu_custom_call.1} parent=11 // pred_region
        _
      $region16: #{tpu_custom_call.1} parent=11 // pred_fallthru
        _
      // Predicated region
      $region17: #{tpu_custom_call.1} parent=11 // pred_check
        %p137 = pneg %p91
      $region18: #{tpu_custom_call.1} parent=11 // pred_check_branch
        %139 = sbr.rel (%p137) target = $region20
      $region19: #{tpu_custom_call.1} parent=11 // pred_region
        _
      $region20: #{tpu_custom_call.1} parent=11 // pred_fallthru
        _
    $region12: #{tpu_custom_call.1} parent=5 // pred_fallthru
      _
    %p140 = scmp.lt.s32.totalorder %s9, 2
    // Predicated region
    $region21: #{tpu_custom_call.1} parent=5 // pred_check
      %p141 = pneg %p140
    $region22: #{tpu_custom_call.1} parent=5 // pred_check_branch
      %143 = sbr.rel (%p141) target = $region24
    $region23: #{tpu_custom_call.1} parent=5 // pred_region
      // Predicated region
      $region25: #{tpu_custom_call.1} parent=23 // pred_check
        %p144 = pneg %p43
      $region26: #{tpu_custom_call.1} parent=23 // pred_check_branch
        %146 = sbr.rel (%p144) target = $region28
      $region27: #{tpu_custom_call.1} parent=23 // pred_region
        %p147 = scmp.lt.s32.totalorder %s16, 1
        %s148 = scalar_select %p147, %s16, 1
        %p149 = scmp.lt.s32.totalorder %s17, 0
        %s150 = scalar_select %p149, %s17, 0
        %s151 = smul.addr %s148, 2
        %s152 = sadd.s32 %s150, %s151
        %s153 = smul.addr %s152, 8
        %s154 = scalar_lea.vmem %s0, %s153
      $region28: #{tpu_custom_call.1} parent=23 // pred_fallthru
        _
    $region24: #{tpu_custom_call.1} parent=5 // pred_fallthru
      _
    %p155 = scmp.le.s32.totalorder 1, %s9
    %p156 = scmp.lt.s32.totalorder %s9, 3
    %p157 = pnand %p155, %p156
    %p158 = pneg %p157
    // Predicated region
    $region29: #{tpu_custom_call.1} parent=5 // pred_check
      _
    $region30: #{tpu_custom_call.1} parent=5 // pred_check_branch
      %160 = sbr.rel (%p157) target = $region32
    $region31: #{tpu_custom_call.1} parent=5 // pred_region
      %s161 = ssub.s32 %s9, 1
      %p162 = scmp.lt.s32.totalorder %s18, 1
      %s163 = scalar_select %p162, %s18, 1
      %p164 = scmp.lt.s32.totalorder %s19, 0
      %s165 = scalar_select %p164, %s19, 0
      %s166 = smul.addr %s163, 2
      %s167 = sadd.s32 %s165, %s166
      %s168 = smul.addr %s167, 8
      %s169 = scalar_lea.vmem %s0, %s168
      %p170 = pneg %p49
      %p171 = pneg %p46
      %p172 = pneg %p70
      %p173 = pneg %p67
      %p174 = pneg %p91
      %p175 = pneg %p88
      %p176 = pneg %p119
      %p177 = pneg %p116
      %p178 = scmp.lt.s32.totalorder %s18, 1
      %s179 = scalar_select %p178, %s18, 1
      %p180 = scmp.lt.s32.totalorder %s19, 0
      %s181 = scalar_select %p180, %s19, 0
      %s182 = smul.addr %s179, 4
      %s183 = sadd.s32 %s181, %s182
      %s184 = smul.addr %s183, 8
      %s185 = scalar_lea.vmem %s3, %s184
      %p186 = scmp.lt.s32.totalorder %s18, 1
      %s187 = scalar_select %p186, %s18, 1
      %p188 = scmp.lt.s32.totalorder %s19, 0
      %s189 = scalar_select %p188, %s19, 0
      %s190 = smul.addr %s187, 2
      %s191 = sadd.s32 %s189, %s190
      %s192 = smul.addr %s191, 8
      %s193 = scalar_lea.vmem %s0, %s192
      %p194 = scmp.lt.s32.totalorder %s18, 1
      %s195 = scalar_select %p194, %s18, 1
      %p196 = scmp.lt.s32.totalorder %s19, 0
      %s197 = scalar_select %p196, %s19, 0
      %s198 = smul.addr %s195, 4
      %s199 = sadd.s32 %s197, %s198
      %s200 = smul.addr %s199, 8
      %s201 = scalar_lea.vmem %s3, %s200
      %v202 = vld [vmem:[%s1] sm:$0xff]
      %v203 = vld [vmem:[%s1 + $0x8] sm:$0xff]
      %v204 = vld [vmem:[%s1 + $0x10] sm:$0xff]
      %v205 = vld [vmem:[%s1 + $0x18] sm:$0xff]
      %v206 = vld [vmem:[%s193] sm:$0xff]
      %v207 = vld [vmem:[%s193 + $0x8] sm:$0xff]
      %v208 = vld [vmem:[%s2] sm:$0xff]
      %v209 = vld [vmem:[%s2 + $0x8] sm:$0xff]
      %v210 = vld [vmem:[%s2 + $0x10] sm:$0xff]
      %v211 = vld [vmem:[%s2 + $0x18] sm:$0xff]
      %213 = vset.pattern.permute.xlu0 0
      %214 = vperm.xlu0 %213, %v208
      %v215 = vpop.permute.xlu0 %214
      %218 = vset.pattern.permute.xlu0 0
      %219 = vperm.xlu0 %218, %v209
      %v220 = vpop.permute.xlu0 %219
      %223 = vset.pattern.permute.xlu0 0
      %224 = vperm.xlu0 %223, %v210
      %v225 = vpop.permute.xlu0 %224
      %228 = vset.pattern.permute.xlu0 0
      %229 = vperm.xlu0 %228, %v211
      %v230 = vpop.permute.xlu0 %229
      %vm232 = vcmask 130048
      %v234 = vsel %vm232, %v202, 0
      %v237 = vsel %vm232, %v203, 0
      %v240 = vsel %vm232, %v204, 0
      %v243 = vsel %vm232, %v205, 0
      %245 = vmatprep.subr.mxu0 0.0
      %246 = vmatpush1.msra.mxu0 %v206
      %247 = vmatprep.subr.mxu0 0.0
      %248 = vmatpush1.msra.mxu0 %v207
      %249 = vmatprep.subr.mxu0 0.0
      %250 = vmatpush1.msra.mxu0 0.0
      %251 = vmatprep.subr.mxu0 0.0
      %252 = vmatpush1.msra.mxu0 0.0
      %253 = vmatprep.subr.mxu0 0.0
      %254 = vmatpush1.msra.mxu0 0.0
      %255 = vmatprep.subr.mxu0 0.0
      %256 = vmatpush1.msra.mxu0 0.0
      %257 = vmatprep.subr.mxu0 0.0
      %258 = vmatpush1.msra.mxu0 0.0
      %259 = vmatprep.subr.mxu0 0.0
      %260 = vmatpush1.msra.mxu0 0.0
      %261 = vmatprep.subr.mxu0 0.0
      %262 = vmatpush1.msra.mxu0 0.0
      %263 = vmatprep.subr.mxu0 0.0
      %264 = vmatpush1.msra.mxu0 0.0
      %265 = vmatprep.subr.mxu0 0.0
      %266 = vmatpush1.msra.mxu0 0.0
      %267 = vmatprep.subr.mxu0 0.0
      %268 = vmatpush1.msra.mxu0 0.0
      %269 = vmatprep.subr.mxu0 0.0
      %270 = vmatpush1.msra.mxu0 0.0
      %271 = vmatprep.subr.mxu0 0.0
      %272 = vmatpush1.msra.mxu0 0.0
      %273 = vmatprep.subr.mxu0 0.0
      %274 = vmatpush1.msra.mxu0 0.0
      %275 = vmatprep.subr.mxu0 0.0
      %276 = vmatpush1.msra.mxu0 0.0
      %277 = vmatprep.subr.mxu0 0.0
      %278 = vmatpush1.msra.mxu0 0.0
      %279 = vmatprep.subr.mxu0 0.0
      %280 = vmatpush1.msra.mxu0 0.0
      %281 = vmatprep.subr.mxu0 0.0
      %282 = vmatpush1.msra.mxu0 0.0
      %283 = vmatprep.subr.mxu0 0.0
      %284 = vmatpush1.msra.mxu0 0.0
      %285 = vmatprep.subr.mxu0 0.0
      %286 = vmatpush1.msra.mxu0 0.0
      %287 = vmatprep.subr.mxu0 0.0
      %288 = vmatpush1.msra.mxu0 0.0
      %289 = vmatprep.subr.mxu0 0.0
      %290 = vmatpush1.msra.mxu0 0.0
      %291 = vmatprep.subr.mxu0 0.0
      %292 = vmatpush1.msra.mxu0 0.0
      %293 = vmatprep.subr.mxu0 0.0
      %294 = vmatpush1.msra.mxu0 0.0
      %295 = vmatprep.subr.mxu0 0.0
      %296 = vmatpush1.msra.mxu0 0.0
      %297 = vmatprep.subr.mxu0 0.0
      %298 = vmatpush1.msra.mxu0 0.0
      %299 = vmatprep.subr.mxu0 0.0
      %300 = vmatpush1.msra.mxu0 0.0
      %301 = vmatprep.subr.mxu0 0.0
      %302 = vmatpush1.msra.mxu0 0.0
      %303 = vmatprep.subr.mxu0 0.0
      %304 = vmatpush1.msra.mxu0 0.0
      %305 = vmatprep.subr.mxu0 0.0
      %306 = vmatpush1.msra.mxu0 0.0
      %307 = vmatprep.subr.mxu0 0.0
      %308 = vmatpush1.msra.mxu0 0.0
      %309 = vmatprep.mubr.f32.mxu0 0.0
      %310 = vmatmul.mubr.f32.gmra.mrb[0].mxu0 %v234
      %v311 = vpop.f32.mrb[0].mxu0
      %v312 = vadd.f32 %v215, %v311
      %v313 = vpop.f32.mrb[0].mxu0
      %314 = vmatprep.mubr.f32.mxu0 0.0
      %315 = vmatmul.mubr.f32.gmra.mrb[0].mxu0 %v237
      %v316 = vpop.f32.mrb[0].mxu0
      %v317 = vadd.f32 %v220, %v316
      %v318 = vpop.f32.mrb[0].mxu0
      %319 = vmatprep.mubr.f32.mxu0 0.0
      %320 = vmatmul.mubr.f32.gmra.mrb[0].mxu0 %v240
      %v321 = vpop.f32.mrb[0].mxu0
      %v322 = vadd.f32 %v225, %v321
      %v323 = vpop.f32.mrb[0].mxu0
      %324 = vmatprep.mubr.f32.mxu0 0.0
      %325 = vmatmul.mubr.f32.gmra.mrb[0].mxu0 %v243
      %v326 = vpop.f32.mrb[0].mxu0
      %v327 = vadd.f32 %v230, %v326
      %v328 = vpop.f32.mrb[0].mxu0
      %329 = vdwg.mxu0
      %v330 = vmax.f32 %v312, 0.0
      %v331 = vmax.f32 %v317, 0.0
      %v332 = vmax.f32 %v322, 0.0
      %v333 = vmax.f32 %v327, 0.0
      %vm334 = vcmask 203776
      %335 = vst.msk [vmem:[%s201] sm:$0xff] %vm334, %v330
      %336 = vst.msk [vmem:[%s201 + $0x8] sm:$0xff] %vm334, %v331
      %337 = vst.msk [vmem:[%s201 + $0x10] sm:$0xff] %vm334, %v332
      %338 = vst.msk [vmem:[%s201 + $0x18] sm:$0xff] %vm334, %v333
      %p339 = scmp.lt.s32.totalorder %s18, 1
      %s340 = scalar_select %p339, %s18, 1
      %p341 = scmp.lt.s32.totalorder %s19, 0
      %s342 = scalar_select %p341, %s19, 0
      %s343 = smul.addr %s340, 4
      %s344 = sadd.s32 %s342, %s343
      %s345 = smul.addr %s344, 8
      %s346 = scalar_lea.vmem %s3, %s345
      // Predicated region
      $region33: #{tpu_custom_call.1} parent=31 // pred_check
        %p347 = pneg %p116
      $region34: #{tpu_custom_call.1} parent=31 // pred_check_branch
        %349 = sbr.rel (%p347) target = $region36
      $region35: #{tpu_custom_call.1} parent=31 // pred_region
        _
      $region36: #{tpu_custom_call.1} parent=31 // pred_fallthru
        _
    $region32: #{tpu_custom_call.1} parent=5 // pred_fallthru
      _
    %p350 = scmp.le.s32.totalorder 2, %s9
    // Predicated region
    $region37: #{tpu_custom_call.1} parent=5 // pred_check
      %p351 = pneg %p350
    $region38: #{tpu_custom_call.1} parent=5 // pred_check_branch
      %353 = sbr.rel (%p351) target = $region40
    $region39: #{tpu_custom_call.1} parent=5 // pred_region
      %s354 = ssub.s32 %s9, 2
      // Predicated region
      $region41: #{tpu_custom_call.1} parent=39 // pred_check
        %p355 = pneg %p122
      $region42: #{tpu_custom_call.1} parent=39 // pred_check_branch
        %357 = sbr.rel (%p355) target = $region44
      $region43: #{tpu_custom_call.1} parent=39 // pred_region
        %p358 = scmp.lt.s32.totalorder %s20, 1
        %s359 = scalar_select %p358, %s20, 1
        %p360 = scmp.lt.s32.totalorder %s21, 0
        %s361 = scalar_select %p360, %s21, 0
        %s362 = smul.addr %s359, 4
        %s363 = sadd.s32 %s361, %s362
        %s364 = smul.addr %s363, 8
        %s365 = scalar_lea.vmem %s3, %s364
      $region44: #{tpu_custom_call.1} parent=39 // pred_fallthru
        _
    $region40: #{tpu_custom_call.1} parent=5 // pred_fallthru
      _
  $region6: #{tpu_custom_call.1} parent=0 // loop_footer
    %s13 = sadd.s32 1, %s9
  $region7: #{tpu_custom_call.1} parent=0 // loop_footer_branch
    %8 = sbr.rel target = $region3
  $region8: #{tpu_custom_call.1} parent=0 // loop_exit
    _

</llo_original>
